<compile_context>
chip_gen: v7x
topology: tpu7x:2x2x1
jax: 0.10.0
libtpu: 0.0.40
codegen_flags: <defaults>
</compile_context>

<pallas_src>
import functools

import jax
import jax.numpy as jnp
from jax.experimental import pallas as pl
from jax.experimental.pallas import tpu as pltpu


def _round_up(x, m):
    return (x + m - 1) // m * m


def ernn_kernel(x_ref, h0_ref, w1_ref, b1_ref, wih_ref, whh_ref,
                bih_ref, bhh_ref, w2_ref, b2_ref,
                q_ref, h_out_ref, h_scr):
    """One grid step == one timestep of ERNNAgent.forward for ALL agents.

    Packed, lane-padded, agent-major layouts (NHp = pad128(N*H), NAp = pad128(N*A)):
      x    (1, Bp, D)      shared input for this timestep
      h0   (Bp, NHp)       initial lane-concatenated hidden (read at t == 0)
      w1   (D, NHp)        fc1 weights, agents concatenated on the lane axis
      wih  (NHp, 3*NHp)    GRU x->gates, block-diag over agents; gate blocks
                           [r | z | n], each NHp lanes wide (128-aligned)
      whh  (NHp, 3*NHp)    GRU h->gates, same layout
      bih / bhh (1, 3*NHp)
      w2   (NHp, NAp)      fc2, block-diag over agents
      q    (1, Bp, NAp)    per-step Q slab (lane-dense)
      h_out(Bp, NHp)       final hidden state
      h_scr(Bp, NHp)       VMEM-resident recurrent state carried across steps
    """
    t = pl.program_id(0)
    nhp = h_scr.shape[-1]

    @pl.when(t == 0)
    def _():
        h_scr[...] = h0_ref[...]

    x = x_ref[0]          # (Bp, D)
    h = h_scr[...]        # (Bp, NHp)

    # fc1 + ReLU for all agents at once.
    x1 = jnp.dot(x, w1_ref[...], preferred_element_type=jnp.float32) + b1_ref[...]
    x1 = jnp.maximum(x1, 0.0)

    # GRUCell (PyTorch gate order r, z, n): two fused matmuls, then gate slices
    # at lane offsets 0 / NHp / 2*NHp (tile-aligned, no lane-crossing copies).
    gi = jnp.dot(x1, wih_ref[...], preferred_element_type=jnp.float32) + bih_ref[...]
    gh = jnp.dot(h, whh_ref[...], preferred_element_type=jnp.float32) + bhh_ref[...]

    r = jax.nn.sigmoid(gi[:, :nhp] + gh[:, :nhp])
    z = jax.nn.sigmoid(gi[:, nhp:2 * nhp] + gh[:, nhp:2 * nhp])
    n = jnp.tanh(gi[:, 2 * nhp:] + r * gh[:, 2 * nhp:])
    h_new = (1.0 - z) * n + z * h

    # fc2 for all agents at once (block-diagonal weights).
    q = jnp.dot(h_new, w2_ref[...], preferred_element_type=jnp.float32) + b2_ref[...]

    q_ref[0] = q
    h_scr[...] = h_new
    h_out_ref[...] = h_new


def pack_params(params, lane=128):
    """One-time host-side repack of per-agent weights into the fused layouts:
    agents concatenated / block-diagonal on the lane axis, gate blocks padded
    to 128-lane boundaries, everything zero-padded so outputs are lane-dense."""
    w1, b1 = params["w1"], params["b1"]          # (N, D, H), (N, H)
    wih, whh = params["wih"], params["whh"]      # (N, H, 3H)  (= torch weight_ih.T)
    bih, bhh = params["bih"], params["bhh"]      # (N, 3H)
    w2, b2 = params["w2"], params["b2"]          # (N, H, A), (N, A)
    N, D, H = w1.shape
    A = w2.shape[-1]
    NH, NA = N * H, N * A
    NHp = _round_up(NH, lane)
    NAp = _round_up(NA, lane)
    eye = jnp.eye(N, dtype=jnp.float32)

    def pad2(m, rows, cols):
        return jnp.pad(m, ((0, rows - m.shape[0]), (0, cols - m.shape[1])))

    def blockdiag(w):  # (N, H, O) -> (N*H, N*O) block-diagonal over agents
        n, h, o = w.shape
        return jnp.einsum('ipq,ij->ipjq', w, eye).reshape(n * h, n * o)

    def gate_blockdiag(w):  # (N, H, 3H) -> (NHp, 3*NHp), gate blocks [r|z|n]
        wg = w.reshape(N, H, 3, H).transpose(2, 0, 1, 3)        # (3, N, H, H)
        return jnp.concatenate(
            [pad2(blockdiag(wg[g]), NHp, NHp) for g in range(3)], axis=1)

    def gate_bias(b):  # (N, 3H) -> (1, 3*NHp)
        bg = b.reshape(N, 3, H).transpose(1, 0, 2).reshape(3, NH)
        return jnp.concatenate(
            [jnp.pad(bg[g], (0, NHp - NH)) for g in range(3)]).reshape(1, 3 * NHp)

    return {
        "w1": pad2(w1.transpose(1, 0, 2).reshape(D, NH), D, NHp),
        "b1": jnp.pad(b1.reshape(1, NH), ((0, 0), (0, NHp - NH))),
        "wih": gate_blockdiag(wih),
        "whh": gate_blockdiag(whh),
        "bih": gate_bias(bih),
        "bhh": gate_bias(bhh),
        "w2": pad2(blockdiag(w2), NHp, NAp),
        "b2": jnp.pad(b2.reshape(1, NA), ((0, 0), (0, NAp - NA))),
    }


@functools.partial(jax.jit, static_argnames=("n_actions",))
def ernn_rollout(inputs_seq, hidden0, packed, *, n_actions):
    """Apply ERNNAgent.forward over a T-step rollout in ONE pallas_call.

    inputs_seq: (T, B, D); hidden0: (N, B, H).
    Returns q (T, B, A, N)  (per step == torch.stack(q_list, dim=-1))
            h_final (N, B, H)  (h_list after the last step).
    """
    # TODO(synk): sc2 noise branch (inputs += torch.rand(...) * 0.02) omitted; args.env != 'sc2'.
    T, B, D = inputs_seq.shape
    N, _, H = hidden0.shape
    A = n_actions
    NH, NA = N * H, N * A
    NHp = packed["w1"].shape[-1]
    NAp = packed["b2"].shape[-1]
    Bp = _round_up(B, 8)                       # fill f32 sublanes

    x_seq = jnp.pad(inputs_seq.astype(jnp.float32),
                    ((0, 0), (0, Bp - B), (0, 0)))
    h0 = hidden0.astype(jnp.float32).transpose(1, 0, 2).reshape(B, NH)
    h0 = jnp.pad(h0, ((0, Bp - B), (0, NHp - NH)))

    const2 = lambda t: (0, 0)
    q_seq, h_fin = pl.pallas_call(
        ernn_kernel,
        grid=(T,),
        out_shape=(jax.ShapeDtypeStruct((T, Bp, NAp), jnp.float32),
                   jax.ShapeDtypeStruct((Bp, NHp), jnp.float32)),
        in_specs=[
            pl.BlockSpec((1, Bp, D), lambda t: (t, 0, 0)),   # x_t (per step)
            pl.BlockSpec((Bp, NHp), const2),                 # h0  (resident)
            pl.BlockSpec((D, NHp), const2),                  # w1  (resident)
            pl.BlockSpec((1, NHp), const2),                  # b1
            pl.BlockSpec((NHp, 3 * NHp), const2),            # wih
            pl.BlockSpec((NHp, 3 * NHp), const2),            # whh
            pl.BlockSpec((1, 3 * NHp), const2),              # bih
            pl.BlockSpec((1, 3 * NHp), const2),              # bhh
            pl.BlockSpec((NHp, NAp), const2),                # w2
            pl.BlockSpec((1, NAp), const2),                  # b2
        ],
        out_specs=(
            pl.BlockSpec((1, Bp, NAp), lambda t: (t, 0, 0)),  # q_t (per step)
            pl.BlockSpec((Bp, NHp), const2),                  # h_final (resident)
        ),
        scratch_shapes=[pltpu.VMEM((Bp, NHp), jnp.float32)],  # recurrent state
        compiler_params=pltpu.CompilerParams(
            dimension_semantics=("arbitrary",)),              # carried state -> sequential
    )(x_seq, h0, packed["w1"], packed["b1"], packed["wih"], packed["whh"],
      packed["bih"], packed["bhh"], packed["w2"], packed["b2"])

    # Unpack ONCE for the whole rollout (not per step).
    q = q_seq[:, :B, :NA].reshape(T, B, N, A).transpose(0, 1, 3, 2)
    h_final = h_fin[:B, :NH].reshape(B, N, H).transpose(1, 0, 2)
    return q, h_final


def ernn_reference_step(inputs, hidden, params):
    """Pure-JAX transcription of ERNNAgent.forward (per-agent loop)."""
    N, _, H = hidden.shape
    hp = jax.lax.Precision.HIGHEST
    q_list, h_list = [], []
    for i in range(N):
        x1 = jnp.maximum(
            jnp.dot(inputs, params["w1"][i], precision=hp) + params["b1"][i], 0.0)
        gi = jnp.dot(x1, params["wih"][i], precision=hp) + params["bih"][i]
        gh = jnp.dot(hidden[i], params["whh"][i], precision=hp) + params["bhh"][i]
        r = jax.nn.sigmoid(gi[:, :H] + gh[:, :H])
        z = jax.nn.sigmoid(gi[:, H:2 * H] + gh[:, H:2 * H])
        n = jnp.tanh(gi[:, 2 * H:] + r * gh[:, 2 * H:])
        h_new = (1.0 - z) * n + z * hidden[i]
        q_list.append(jnp.dot(h_new, params["w2"][i], precision=hp) + params["b2"][i])
        h_list.append(h_new)
    return jnp.stack(q_list, axis=-1), jnp.stack(h_list, axis=0)


def ernn_reference_rollout(inputs_seq, hidden0, params):
    qs, h = [], hidden0
    for t in range(inputs_seq.shape[0]):
        q, h = ernn_reference_step(inputs_seq[t], h, params)
        qs.append(q)
    return jnp.stack(qs, axis=0), h


def init_params(key, N, D, H, A):
    ks = jax.random.split(key, 8)
    u = lambda k, shape, fan_in: jax.random.uniform(
        k, shape, jnp.float32, -1.0 / jnp.sqrt(fan_in), 1.0 / jnp.sqrt(fan_in))
    return {
        "w1": u(ks[0], (N, D, H), D),
        "b1": u(ks[1], (N, H), D),
        "wih": u(ks[2], (N, H, 3 * H), H),
        "whh": u(ks[3], (N, H, 3 * H), H),
        "bih": u(ks[4], (N, 3 * H), H),
        "bhh": u(ks[5], (N, 3 * H), H),
        "w2": u(ks[6], (N, H, A), H),
        "b2": u(ks[7], (N, A), H),
    }


if __name__ == "__main__":
    # Shapes consistent with the module: agent_N=3, input_shape=32,
    # rnn_hidden_dim=32, n_actions=8, batch=4; T=8 rollout steps.
    N, B, D, H, A, T = 3, 4, 32, 32, 8, 8

    key = jax.random.PRNGKey(0)
    k_in, k_h, k_p = jax.random.split(key, 3)
    inputs_seq = jax.random.normal(k_in, (T, B, D), dtype=jnp.float32)
    hidden0 = jax.random.normal(k_h, (N, B, H), dtype=jnp.float32)
    params = init_params(k_p, N, D, H, A)
    packed = pack_params(params)   # one-time weight repack (block-diag / pad)

    q, h_final = ernn_rollout(inputs_seq, hidden0, packed, n_actions=A)
    q = jax.block_until_ready(q)
    h_final = jax.block_until_ready(h_final)

    q_ref, h_ref = ernn_reference_rollout(inputs_seq, hidden0, params)
    assert q.shape == (T, B, A, N)
    assert h_final.shape == (N, B, H)
    assert jnp.allclose(q, q_ref, rtol=1e-3, atol=1e-3), \
        float(jnp.max(jnp.abs(q - q_ref)))
    assert jnp.allclose(h_final, h_ref, rtol=1e-3, atol=1e-3), \
        float(jnp.max(jnp.abs(h_final - h_ref)))

    print("KERNEL_OK")
</pallas_src>

<mosaic_0001>
module attributes {stable_mosaic.version = 11 : i64} {
  func.func @ernn_kernel(%arg0: i32, %arg1: memref<1x8x32xf32, #tpu.memory_space<vmem>>, %arg2: memref<8x128xf32, #tpu.memory_space<vmem>>, %arg3: memref<32x128xf32, #tpu.memory_space<vmem>>, %arg4: memref<1x128xf32, #tpu.memory_space<vmem>>, %arg5: memref<128x384xf32, #tpu.memory_space<vmem>>, %arg6: memref<128x384xf32, #tpu.memory_space<vmem>>, %arg7: memref<1x384xf32, #tpu.memory_space<vmem>>, %arg8: memref<1x384xf32, #tpu.memory_space<vmem>>, %arg9: memref<128x128xf32, #tpu.memory_space<vmem>>, %arg10: memref<1x128xf32, #tpu.memory_space<vmem>>, %arg11: memref<1x8x128xf32, #tpu.memory_space<vmem>>, %arg12: memref<8x128xf32, #tpu.memory_space<vmem>>, %arg13: memref<8x128xf32, #tpu.memory_space<vmem>>) attributes {dimension_semantics = [#tpu.dimension_semantics<arbitrary>], iteration_bounds = array<i64: 8>, scalar_prefetch = 0 : i64, scratch_operands = 1 : i64, tpu.core_type = #tpu.core_type<tc>, window_params = [{transform_indices = @transform_0, window_bounds = array<i64: 1, 8, 32>}, {pipeline_mode = #tpu.pipeline_mode<synchronous>, transform_indices = @transform_1, window_bounds = array<i64: 8, 128>}, {pipeline_mode = #tpu.pipeline_mode<synchronous>, transform_indices = @transform_2, window_bounds = array<i64: 32, 128>}, {pipeline_mode = #tpu.pipeline_mode<synchronous>, transform_indices = @transform_3, window_bounds = array<i64: 1, 128>}, {pipeline_mode = #tpu.pipeline_mode<synchronous>, transform_indices = @transform_4, window_bounds = array<i64: 128, 384>}, {pipeline_mode = #tpu.pipeline_mode<synchronous>, transform_indices = @transform_5, window_bounds = array<i64: 128, 384>}, {pipeline_mode = #tpu.pipeline_mode<synchronous>, transform_indices = @transform_6, window_bounds = array<i64: 1, 384>}, {pipeline_mode = #tpu.pipeline_mode<synchronous>, transform_indices = @transform_7, window_bounds = array<i64: 1, 384>}, {pipeline_mode = #tpu.pipeline_mode<synchronous>, transform_indices = @transform_8, window_bounds = array<i64: 128, 128>}, {pipeline_mode = #tpu.pipeline_mode<synchronous>, transform_indices = @transform_9, window_bounds = array<i64: 1, 128>}, {transform_indices = @transform_10, window_bounds = array<i64: 1, 8, 128>}, {pipeline_mode = #tpu.pipeline_mode<synchronous>, transform_indices = @transform_11, window_bounds = array<i64: 8, 128>}]} {
    %c0_i32 = arith.constant 0 : i32
    %0 = arith.cmpi eq, %arg0, %c0_i32 : i32
    %1 = arith.extui %0 : i1 to i32
    %c0_i32_0 = arith.constant 0 : i32
    %2 = arith.cmpi ne, %1, %c0_i32_0 : i32
    scf.if %2 {
      %c0_35 = arith.constant 0 : index
      %c0_36 = arith.constant 0 : index
      %59 = vector.load %arg2[%c0_35, %c0_36] : memref<8x128xf32, #tpu.memory_space<vmem>>, vector<8x128xf32>
      %c0_37 = arith.constant 0 : index
      %c0_38 = arith.constant 0 : index
      %60 = vector.load %arg13[%c0_37, %c0_38] : memref<8x128xf32, #tpu.memory_space<vmem>>, vector<8x128xf32>
      tpu.vector_store %arg13[%c0_37, %c0_38], %59 {strides = array<i32>} : memref<8x128xf32, #tpu.memory_space<vmem>>, vector<8x128xf32>,
    } else {
    }
    %c0 = arith.constant 0 : index
    %c0_1 = arith.constant 0 : index
    %c0_2 = arith.constant 0 : index
    %3 = vector.load %arg1[%c0, %c0_1, %c0_2] : memref<1x8x32xf32, #tpu.memory_space<vmem>>, vector<1x8x32xf32>
    %4 = vector.shape_cast %3 : vector<1x8x32xf32> to vector<8x32xf32>
    %c0_3 = arith.constant 0 : index
    %c0_4 = arith.constant 0 : index
    %5 = vector.load %arg13[%c0_3, %c0_4] : memref<8x128xf32, #tpu.memory_space<vmem>>, vector<8x128xf32>
    %c0_5 = arith.constant 0 : index
    %c0_6 = arith.constant 0 : index
    %6 = vector.load %arg3[%c0_5, %c0_6] : memref<32x128xf32, #tpu.memory_space<vmem>>, vector<32x128xf32>
    %cst = arith.constant dense<0.000000e+00> : vector<8x128xf32>
    %7 = tpu.matmul %4, %6, %cst {dimension_numbers = #tpu.dot_dimension_numbers<[1], [0], [0], [1], [0, 0, 1, 1], [], []>} : vector<8x32xf32>, vector<32x128xf32>, vector<8x128xf32> -> vector<8x128xf32>
    %c0_7 = arith.constant 0 : index
    %c0_8 = arith.constant 0 : index
    %8 = vector.load %arg4[%c0_7, %c0_8] : memref<1x128xf32, #tpu.memory_space<vmem>>, vector<1x128xf32>
    %9 = vector.broadcast %8 : vector<1x128xf32> to vector<8x128xf32>
    %10 = arith.addf %7, %9 : vector<8x128xf32>
    %cst_9 = arith.constant 0.000000e+00 : f32
    %11 = vector.broadcast %cst_9 : f32 to vector<8x128xf32>
    %12 = arith.maximumf %10, %11 : vector<8x128xf32>
    %c0_10 = arith.constant 0 : index
    %c0_11 = arith.constant 0 : index
    %13 = vector.load %arg5[%c0_10, %c0_11] : memref<128x384xf32, #tpu.memory_space<vmem>>, vector<128x384xf32>
    %cst_12 = arith.constant dense<0.000000e+00> : vector<8x384xf32>
    %14 = tpu.matmul %12, %13, %cst_12 {dimension_numbers = #tpu.dot_dimension_numbers<[1], [0], [0], [1], [0, 0, 1, 1], [], []>} : vector<8x128xf32>, vector<128x384xf32>, vector<8x384xf32> -> vector<8x384xf32>
    %c0_13 = arith.constant 0 : index
    %c0_14 = arith.constant 0 : index
    %15 = vector.load %arg7[%c0_13, %c0_14] : memref<1x384xf32, #tpu.memory_space<vmem>>, vector<1x384xf32>
    %16 = vector.broadcast %15 : vector<1x384xf32> to vector<8x384xf32>
    %17 = arith.addf %14, %16 : vector<8x384xf32>
    %c0_15 = arith.constant 0 : index
    %c0_16 = arith.constant 0 : index
    %18 = vector.load %arg6[%c0_15, %c0_16] : memref<128x384xf32, #tpu.memory_space<vmem>>, vector<128x384xf32>
    %cst_17 = arith.constant dense<0.000000e+00> : vector<8x384xf32>
    %19 = tpu.matmul %5, %18, %cst_17 {dimension_numbers = #tpu.dot_dimension_numbers<[1], [0], [0], [1], [0, 0, 1, 1], [], []>} : vector<8x128xf32>, vector<128x384xf32>, vector<8x384xf32> -> vector<8x384xf32>
    %c0_18 = arith.constant 0 : index
    %c0_19 = arith.constant 0 : index
    %20 = vector.load %arg8[%c0_18, %c0_19] : memref<1x384xf32, #tpu.memory_space<vmem>>, vector<1x384xf32>
    %21 = vector.broadcast %20 : vector<1x384xf32> to vector<8x384xf32>
    %22 = arith.addf %19, %21 : vector<8x384xf32>
    %23 = vector.extract_strided_slice %17 {offsets = [0, 0], sizes = [8, 128], strides = [1, 1]} : vector<8x384xf32> to vector<8x128xf32>
    %24 = vector.extract_strided_slice %22 {offsets = [0, 0], sizes = [8, 128], strides = [1, 1]} : vector<8x384xf32> to vector<8x128xf32>
    %25 = arith.addf %23, %24 : vector<8x128xf32>
    %26 = arith.negf %25 : vector<8x128xf32>
    %27 = math.exp %26 : vector<8x128xf32>
    %cst_20 = arith.constant 1.000000e+00 : f32
    %28 = vector.broadcast %cst_20 : f32 to vector<8x128xf32>
    %29 = arith.addf %28, %27 : vector<8x128xf32>
    %30 = arith.divf %28, %29 : vector<8x128xf32>
    %31 = vector.extract_strided_slice %17 {offsets = [0, 128], sizes = [8, 128], strides = [1, 1]} : vector<8x384xf32> to vector<8x128xf32>
    %32 = vector.extract_strided_slice %22 {offsets = [0, 128], sizes = [8, 128], strides = [1, 1]} : vector<8x384xf32> to vector<8x128xf32>
    %33 = arith.addf %31, %32 : vector<8x128xf32>
    %34 = arith.negf %33 : vector<8x128xf32>
    %35 = math.exp %34 : vector<8x128xf32>
    %cst_21 = arith.constant 1.000000e+00 : f32
    %36 = vector.broadcast %cst_21 : f32 to vector<8x128xf32>
    %37 = arith.addf %36, %35 : vector<8x128xf32>
    %38 = arith.divf %36, %37 : vector<8x128xf32>
    %39 = vector.extract_strided_slice %17 {offsets = [0, 256], sizes = [8, 128], strides = [1, 1]} : vector<8x384xf32> to vector<8x128xf32>
    %40 = vector.extract_strided_slice %22 {offsets = [0, 256], sizes = [8, 128], strides = [1, 1]} : vector<8x384xf32> to vector<8x128xf32>
    %41 = arith.mulf %30, %40 : vector<8x128xf32>
    %42 = arith.addf %39, %41 : vector<8x128xf32>
    %43 = math.tanh %42 : vector<8x128xf32>
    %cst_22 = arith.constant 1.000000e+00 : f32
    %44 = vector.broadcast %cst_22 : f32 to vector<8x128xf32>
    %45 = arith.subf %44, %38 : vector<8x128xf32>
    %46 = arith.mulf %45, %43 : vector<8x128xf32>
    %47 = arith.mulf %38, %5 : vector<8x128xf32>
    %48 = arith.addf %46, %47 : vector<8x128xf32>
    %c0_23 = arith.constant 0 : index
    %c0_24 = arith.constant 0 : index
    %49 = vector.load %arg9[%c0_23, %c0_24] : memref<128x128xf32, #tpu.memory_space<vmem>>, vector<128x128xf32>
    %cst_25 = arith.constant dense<0.000000e+00> : vector<8x128xf32>
    %50 = tpu.matmul %48, %49, %cst_25 {dimension_numbers = #tpu.dot_dimension_numbers<[1], [0], [0], [1], [0, 0, 1, 1], [], []>} : vector<8x128xf32>, vector<128x128xf32>, vector<8x128xf32> -> vector<8x128xf32>
    %c0_26 = arith.constant 0 : index
    %c0_27 = arith.constant 0 : index
    %51 = vector.load %arg10[%c0_26, %c0_27] : memref<1x128xf32, #tpu.memory_space<vmem>>, vector<1x128xf32>
    %52 = vector.broadcast %51 : vector<1x128xf32> to vector<8x128xf32>
    %53 = arith.addf %50, %52 : vector<8x128xf32>
    %c0_28 = arith.constant 0 : index
    %c0_29 = arith.constant 0 : index
    %c0_30 = arith.constant 0 : index
    %54 = vector.load %arg11[%c0_28, %c0_29, %c0_30] : memref<1x8x128xf32, #tpu.memory_space<vmem>>, vector<1x8x128xf32>
    %55 = vector.shape_cast %54 : vector<1x8x128xf32> to vector<8x128xf32>
    %56 = vector.shape_cast %53 : vector<8x128xf32> to vector<1x8x128xf32>
    tpu.vector_store %arg11[%c0_28, %c0_29, %c0_30], %56 {strides = array<i32>} : memref<1x8x128xf32, #tpu.memory_space<vmem>>, vector<1x8x128xf32>,
    %c0_31 = arith.constant 0 : index
    %c0_32 = arith.constant 0 : index
    %57 = vector.load %arg13[%c0_31, %c0_32] : memref<8x128xf32, #tpu.memory_space<vmem>>, vector<8x128xf32>
    tpu.vector_store %arg13[%c0_31, %c0_32], %48 {strides = array<i32>} : memref<8x128xf32, #tpu.memory_space<vmem>>, vector<8x128xf32>,
    %c0_33 = arith.constant 0 : index
    %c0_34 = arith.constant 0 : index
    %58 = vector.load %arg12[%c0_33, %c0_34] : memref<8x128xf32, #tpu.memory_space<vmem>>, vector<8x128xf32>
    tpu.vector_store %arg12[%c0_33, %c0_34], %48 {strides = array<i32>} : memref<8x128xf32, #tpu.memory_space<vmem>>, vector<8x128xf32>,
    return
  }
  func.func @transform_0(%arg0: i32) -> (i32, i32, i32) {
    %c0_i32 = arith.constant 0 : i32
    %c0_i32_0 = arith.constant 0 : i32
    %c0_i32_1 = arith.constant 0 : i32
    return %arg0, %c0_i32, %c0_i32_0 : i32, i32, i32
  }
  func.func @transform_1(%arg0: i32) -> (i32, i32) {
    %c0_i32 = arith.constant 0 : i32
    %c0_i32_0 = arith.constant 0 : i32
    %c0_i32_1 = arith.constant 0 : i32
    return %c0_i32, %c0_i32_0 : i32, i32
  }
  func.func @transform_2(%arg0: i32) -> (i32, i32) {
    %c0_i32 = arith.constant 0 : i32
    %c0_i32_0 = arith.constant 0 : i32
    %c0_i32_1 = arith.constant 0 : i32
    return %c0_i32, %c0_i32_0 : i32, i32
  }
  func.func @transform_3(%arg0: i32) -> (i32, i32) {
    %c0_i32 = arith.constant 0 : i32
    %c0_i32_0 = arith.constant 0 : i32
    %c0_i32_1 = arith.constant 0 : i32
    return %c0_i32, %c0_i32_0 : i32, i32
  }
  func.func @transform_4(%arg0: i32) -> (i32, i32) {
    %c0_i32 = arith.constant 0 : i32
    %c0_i32_0 = arith.constant 0 : i32
    %c0_i32_1 = arith.constant 0 : i32
    return %c0_i32, %c0_i32_0 : i32, i32
  }
  func.func @transform_5(%arg0: i32) -> (i32, i32) {
    %c0_i32 = arith.constant 0 : i32
    %c0_i32_0 = arith.constant 0 : i32
    %c0_i32_1 = arith.constant 0 : i32
    return %c0_i32, %c0_i32_0 : i32, i32
  }
  func.func @transform_6(%arg0: i32) -> (i32, i32) {
    %c0_i32 = arith.constant 0 : i32
    %c0_i32_0 = arith.constant 0 : i32
    %c0_i32_1 = arith.constant 0 : i32
    return %c0_i32, %c0_i32_0 : i32, i32
  }
  func.func @transform_7(%arg0: i32) -> (i32, i32) {
    %c0_i32 = arith.constant 0 : i32
    %c0_i32_0 = arith.constant 0 : i32
    %c0_i32_1 = arith.constant 0 : i32
    return %c0_i32, %c0_i32_0 : i32, i32
  }
  func.func @transform_8(%arg0: i32) -> (i32, i32) {
    %c0_i32 = arith.constant 0 : i32
    %c0_i32_0 = arith.constant 0 : i32
    %c0_i32_1 = arith.constant 0 : i32
    return %c0_i32, %c0_i32_0 : i32, i32
  }
  func.func @transform_9(%arg0: i32) -> (i32, i32) {
    %c0_i32 = arith.constant 0 : i32
    %c0_i32_0 = arith.constant 0 : i32
    %c0_i32_1 = arith.constant 0 : i32
    return %c0_i32, %c0_i32_0 : i32, i32
  }
  func.func @transform_10(%arg0: i32) -> (i32, i32, i32) {
    %c0_i32 = arith.constant 0 : i32
    %c0_i32_0 = arith.constant 0 : i32
    %c0_i32_1 = arith.constant 0 : i32
    return %arg0, %c0_i32, %c0_i32_0 : i32, i32, i32
  }
  func.func @transform_11(%arg0: i32) -> (i32, i32) {
    %c0_i32 = arith.constant 0 : i32
    %c0_i32_0 = arith.constant 0 : i32
    %c0_i32_1 = arith.constant 0 : i32
    return %c0_i32, %c0_i32_0 : i32, i32
  }
}

</mosaic_0001>

<llo_original>
// kernel: ernn_rollout.1
$region0: #{ernn_rollout.1}
  #allocation0 [shape = 'u32[]', space=smem, size = 0x4, offset = 0x4, fixed_abs, tag = 'smem constant byte address 0x4 - core index']
  #allocation1 [shape = 'u32[144,128]{1,0:T(1,128)}', space=vmem, size = 0x12000, scoped, tag = 'internal scratch']
  #allocation2 [shape = 'f32[8,128]{1,0:T(8,128)}', space=vmem, size = 0x1000, scoped, tag = 'scratch operand']
  %s0 = inlined_call_operand.vmem [shape: f32[8,8,32], index: 0, kind: input, shape index: {}]
  %s1 = inlined_call_operand.vmem [shape: f32[8,128], index: 1, kind: input, shape index: {}]
  %s2 = inlined_call_operand.vmem [shape: f32[32,128], index: 2, kind: input, shape index: {}]
  %s3 = inlined_call_operand.hbm [shape: f32[1,128], index: 3, kind: input, shape index: {}]
  %s4 = inlined_call_operand.hbm [shape: f32[128,384], index: 4, kind: input, shape index: {}]
  %s5 = inlined_call_operand.hbm [shape: f32[128,384], index: 5, kind: input, shape index: {}]
  %s6 = inlined_call_operand.vmem [shape: f32[1,384], index: 6, kind: input, shape index: {}]
  %s7 = inlined_call_operand.hbm [shape: f32[1,384], index: 7, kind: input, shape index: {}]
  %s8 = inlined_call_operand.vmem [shape: f32[128,128], index: 8, kind: input, shape index: {}]
  %s9 = inlined_call_operand.hbm [shape: f32[1,128], index: 9, kind: input, shape index: {}]
  %s10 = inlined_call_operand.vmem [shape: f32[8,8,128], index: 10, kind: output, shape index: {0}]
  %s11 = inlined_call_operand.vmem [shape: f32[8,128], index: 11, kind: output, shape index: {1}]
  %12 = xla_tuple %s10, %s11
  %s13 = sld [smem:[#allocation0]]
  $region105: #{ernn_rollout.1} parent=0
    _
  %s15 = ssub.s32 1, %s13
  %s16 = scalar_select 0, %s15, %s13
  $region1: #{ernn_rollout.1} parent=0
    #allocation3 [shape = 'u8[512]{0}', space=vmem, size = 0x400, scoped, tag = 'input window, operand 3, single buffered']
    #allocation4 [shape = 's32[2]{0}', space=sflag, size = 0x8, scoped, tag = 'scoped memory for ernn_rollout.1']
    #allocation5 [shape = 'u8[196608]{0}', space=vmem, size = 0x30000, scoped, tag = 'input window, operand 4, single buffered']
    #allocation6 [shape = 's32[1]{0}', space=sflag, size = 0x4, scoped, tag = 'scoped memory for ernn_rollout.1']
    #allocation7 [shape = 'u8[196608]{0}', space=vmem, size = 0x30000, scoped, tag = 'input window, operand 5, single buffered']
    #allocation8 [shape = 'u8[1536]{0}', space=vmem, size = 0x800, scoped, tag = 'input window, operand 7, single buffered']
    #allocation9 [shape = 's32[1]{0}', space=sflag, size = 0x4, scoped, tag = 'scoped memory for ernn_rollout.1']
    #allocation10 [shape = 'u8[512]{0}', space=vmem, size = 0x400, scoped, tag = 'input window, operand 9, single buffered']
    %17 = vsyncpa [#allocation4], 0
    %18 = vsyncpa [#allocation6], 0
    %19 = vsyncpa [#allocation9], 0
    loop: start=0, step=1, limit=10
    $region2: #{ernn_rollout.1} parent=1 // loop_pre_header
      _
    $region3: #{ernn_rollout.1} parent=1 // loop_header
      %s21 = sphi 0, %s25
      %p22 = scmp.ge.s32.totalorder %s21, 10
      %s31 = sphi 0, %s33
      %s34 = sphi 0, %s31
      %s35 = sphi 0, %s34
      %s51 = sphi 0, %s35
      %s55 = sphi 0, %s55
      %s57 = sphi 0, %s55
      %s58 = sphi 0, %s57
      %s72 = sphi 0, %s58
      %s76 = sphi 0, %s76
      %s78 = sphi 0, %s76
      %s79 = sphi 0, %s78
      %s93 = sphi 0, %s79
      %s97 = sphi 0, %s97
      %s99 = sphi 0, %s97
      %s100 = sphi 0, %s99
      %s114 = sphi 0, %s100
      %s118 = sphi 0, %s118
      %s120 = sphi 0, %s118
      %s121 = sphi 0, %s120
      %s135 = sphi 0, %s121
      %s139 = sphi 0, %s139
      %s141 = sphi 0, %s139
      %s142 = sphi 0, %s141
      %s156 = sphi 0, %s142
      %s160 = sphi 0, %s160
      %s162 = sphi 0, %s160
      %s163 = sphi 0, %s162
      %s177 = sphi 0, %s163
      %s181 = sphi 0, %s181
      %s183 = sphi 0, %s181
      %s184 = sphi 0, %s183
      %s198 = sphi 0, %s184
      %s202 = sphi 0, %s202
      %s204 = sphi 0, %s202
      %s205 = sphi 0, %s204
      %s219 = sphi 0, %s205
      %s223 = sphi 0, %s223
      %s225 = sphi 0, %s223
      %s226 = sphi 0, %s225
      %s240 = sphi 0, %s226
      %s246 = sphi 0, %s248
      %s249 = sphi 0, %s246
      %s250 = sphi 0, %s249
      %s266 = sphi 0, %s250
      %s270 = sphi 0, %s270
      %s272 = sphi 0, %s270
      %s273 = sphi 0, %s272
      %s287 = sphi 0, %s273
    $region4: #{ernn_rollout.1} parent=1 // loop_header_branch
      %24 = sbr.rel (%p22) target = $region8
    $region5: #{ernn_rollout.1} parent=1 // loop_body
      %s26 = ssub.s32 %s21, 1
      %s27 = ssub.s32 %s21, 2
      %s28 = sadd.s32 %s21, 1
      %s29 = ssub.s32 %s21, %s28
      %p30 = scmp.eq.s32.totalorder %s29, 0
      %s32 = sadd.s32 %s31, 1
      %s33 = scalar_select %p30, %s31, %s32
      %p36 = pneg %p30
      %p37 = scmp.eq.s32.totalorder %s21, 7
      %p38 = por %p36, %p37
      %p39 = scmp.ne.s32.totalorder %s31, %s34
      %p40 = scmp.eq.s32.totalorder %s21, 0
      %p41 = por %p39, %p40
      %p42 = scmp.ne.s32.totalorder %s31, %s34
      %p43 = scmp.eq.s32.totalorder %s26, 7
      %p44 = por %p42, %p43
      %p45 = scmp.ne.s32.totalorder %s34, %s35
      %p46 = scmp.eq.s32.totalorder %s26, 0
      %p47 = por %p45, %p46
      %p48 = scmp.ne.s32.totalorder %s34, %s35
      %p49 = scmp.eq.s32.totalorder %s27, 7
      %p50 = por %p48, %p49
      %p52 = scmp.ne.s32.totalorder %s35, %s51
      %p53 = scmp.eq.s32.totalorder %s27, 0
      %p54 = por %p52, %p53
      %s56 = sadd.s32 %s55, 1
      %p59 = scmp.eq.s32.totalorder %s21, 7
      %p60 = scmp.ne.s32.totalorder %s55, %s57
      %p61 = scmp.eq.s32.totalorder %s21, 0
      %p62 = por %p60, %p61
      %p63 = scmp.ne.s32.totalorder %s55, %s57
      %p64 = scmp.eq.s32.totalorder %s26, 7
      %p65 = por %p63, %p64
      %p66 = scmp.ne.s32.totalorder %s57, %s58
      %p67 = scmp.eq.s32.totalorder %s26, 0
      %p68 = por %p66, %p67
      %p69 = scmp.ne.s32.totalorder %s57, %s58
      %p70 = scmp.eq.s32.totalorder %s27, 7
      %p71 = por %p69, %p70
      %p73 = scmp.ne.s32.totalorder %s58, %s72
      %p74 = scmp.eq.s32.totalorder %s27, 0
      %p75 = por %p73, %p74
      %s77 = sadd.s32 %s76, 1
      %p80 = scmp.eq.s32.totalorder %s21, 7
      %p81 = scmp.ne.s32.totalorder %s76, %s78
      %p82 = scmp.eq.s32.totalorder %s21, 0
      %p83 = por %p81, %p82
      %p84 = scmp.ne.s32.totalorder %s76, %s78
      %p85 = scmp.eq.s32.totalorder %s26, 7
      %p86 = por %p84, %p85
      %p87 = scmp.ne.s32.totalorder %s78, %s79
      %p88 = scmp.eq.s32.totalorder %s26, 0
      %p89 = por %p87, %p88
      %p90 = scmp.ne.s32.totalorder %s78, %s79
      %p91 = scmp.eq.s32.totalorder %s27, 7
      %p92 = por %p90, %p91
      %p94 = scmp.ne.s32.totalorder %s79, %s93
      %p95 = scmp.eq.s32.totalorder %s27, 0
      %p96 = por %p94, %p95
      %s98 = sadd.s32 %s97, 1
      %p101 = scmp.eq.s32.totalorder %s21, 7
      %p102 = scmp.ne.s32.totalorder %s97, %s99
      %p103 = scmp.eq.s32.totalorder %s21, 0
      %p104 = por %p102, %p103
      %p105 = scmp.ne.s32.totalorder %s97, %s99
      %p106 = scmp.eq.s32.totalorder %s26, 7
      %p107 = por %p105, %p106
      %p108 = scmp.ne.s32.totalorder %s99, %s100
      %p109 = scmp.eq.s32.totalorder %s26, 0
      %p110 = por %p108, %p109
      %p111 = scmp.ne.s32.totalorder %s99, %s100
      %p112 = scmp.eq.s32.totalorder %s27, 7
      %p113 = por %p111, %p112
      %p115 = scmp.ne.s32.totalorder %s100, %s114
      %p116 = scmp.eq.s32.totalorder %s27, 0
      %p117 = por %p115, %p116
      %s119 = sadd.s32 %s118, 1
      %p122 = scmp.eq.s32.totalorder %s21, 7
      %p123 = scmp.ne.s32.totalorder %s118, %s120
      %p124 = scmp.eq.s32.totalorder %s21, 0
      %p125 = por %p123, %p124
      %p126 = scmp.ne.s32.totalorder %s118, %s120
      %p127 = scmp.eq.s32.totalorder %s26, 7
      %p128 = por %p126, %p127
      %p129 = scmp.ne.s32.totalorder %s120, %s121
      %p130 = scmp.eq.s32.totalorder %s26, 0
      %p131 = por %p129, %p130
      %p132 = scmp.ne.s32.totalorder %s120, %s121
      %p133 = scmp.eq.s32.totalorder %s27, 7
      %p134 = por %p132, %p133
      %p136 = scmp.ne.s32.totalorder %s121, %s135
      %p137 = scmp.eq.s32.totalorder %s27, 0
      %p138 = por %p136, %p137
      %s140 = sadd.s32 %s139, 1
      %p143 = scmp.eq.s32.totalorder %s21, 7
      %p144 = scmp.ne.s32.totalorder %s139, %s141
      %p145 = scmp.eq.s32.totalorder %s21, 0
      %p146 = por %p144, %p145
      %p147 = scmp.ne.s32.totalorder %s139, %s141
      %p148 = scmp.eq.s32.totalorder %s26, 7
      %p149 = por %p147, %p148
      %p150 = scmp.ne.s32.totalorder %s141, %s142
      %p151 = scmp.eq.s32.totalorder %s26, 0
      %p152 = por %p150, %p151
      %p153 = scmp.ne.s32.totalorder %s141, %s142
      %p154 = scmp.eq.s32.totalorder %s27, 7
      %p155 = por %p153, %p154
      %p157 = scmp.ne.s32.totalorder %s142, %s156
      %p158 = scmp.eq.s32.totalorder %s27, 0
      %p159 = por %p157, %p158
      %s161 = sadd.s32 %s160, 1
      %p164 = scmp.eq.s32.totalorder %s21, 7
      %p165 = scmp.ne.s32.totalorder %s160, %s162
      %p166 = scmp.eq.s32.totalorder %s21, 0
      %p167 = por %p165, %p166
      %p168 = scmp.ne.s32.totalorder %s160, %s162
      %p169 = scmp.eq.s32.totalorder %s26, 7
      %p170 = por %p168, %p169
      %p171 = scmp.ne.s32.totalorder %s162, %s163
      %p172 = scmp.eq.s32.totalorder %s26, 0
      %p173 = por %p171, %p172
      %p174 = scmp.ne.s32.totalorder %s162, %s163
      %p175 = scmp.eq.s32.totalorder %s27, 7
      %p176 = por %p174, %p175
      %p178 = scmp.ne.s32.totalorder %s163, %s177
      %p179 = scmp.eq.s32.totalorder %s27, 0
      %p180 = por %p178, %p179
      %s182 = sadd.s32 %s181, 1
      %p185 = scmp.eq.s32.totalorder %s21, 7
      %p186 = scmp.ne.s32.totalorder %s181, %s183
      %p187 = scmp.eq.s32.totalorder %s21, 0
      %p188 = por %p186, %p187
      %p189 = scmp.ne.s32.totalorder %s181, %s183
      %p190 = scmp.eq.s32.totalorder %s26, 7
      %p191 = por %p189, %p190
      %p192 = scmp.ne.s32.totalorder %s183, %s184
      %p193 = scmp.eq.s32.totalorder %s26, 0
      %p194 = por %p192, %p193
      %p195 = scmp.ne.s32.totalorder %s183, %s184
      %p196 = scmp.eq.s32.totalorder %s27, 7
      %p197 = por %p195, %p196
      %p199 = scmp.ne.s32.totalorder %s184, %s198
      %p200 = scmp.eq.s32.totalorder %s27, 0
      %p201 = por %p199, %p200
      %s203 = sadd.s32 %s202, 1
      %p206 = scmp.eq.s32.totalorder %s21, 7
      %p207 = scmp.ne.s32.totalorder %s202, %s204
      %p208 = scmp.eq.s32.totalorder %s21, 0
      %p209 = por %p207, %p208
      %p210 = scmp.ne.s32.totalorder %s202, %s204
      %p211 = scmp.eq.s32.totalorder %s26, 7
      %p212 = por %p210, %p211
      %p213 = scmp.ne.s32.totalorder %s204, %s205
      %p214 = scmp.eq.s32.totalorder %s26, 0
      %p215 = por %p213, %p214
      %p216 = scmp.ne.s32.totalorder %s204, %s205
      %p217 = scmp.eq.s32.totalorder %s27, 7
      %p218 = por %p216, %p217
      %p220 = scmp.ne.s32.totalorder %s205, %s219
      %p221 = scmp.eq.s32.totalorder %s27, 0
      %p222 = por %p220, %p221
      %s224 = sadd.s32 %s223, 1
      %p227 = scmp.eq.s32.totalorder %s21, 7
      %p228 = scmp.ne.s32.totalorder %s223, %s225
      %p229 = scmp.eq.s32.totalorder %s21, 0
      %p230 = por %p228, %p229
      %p231 = scmp.ne.s32.totalorder %s223, %s225
      %p232 = scmp.eq.s32.totalorder %s26, 7
      %p233 = por %p231, %p232
      %p234 = scmp.ne.s32.totalorder %s225, %s226
      %p235 = scmp.eq.s32.totalorder %s26, 0
      %p236 = por %p234, %p235
      %p237 = scmp.ne.s32.totalorder %s225, %s226
      %p238 = scmp.eq.s32.totalorder %s27, 7
      %p239 = por %p237, %p238
      %p241 = scmp.ne.s32.totalorder %s226, %s240
      %p242 = scmp.eq.s32.totalorder %s27, 0
      %p243 = por %p241, %p242
      %s244 = ssub.s32 %s21, %s28
      %p245 = scmp.eq.s32.totalorder %s244, 0
      %s247 = sadd.s32 %s246, 1
      %s248 = scalar_select %p245, %s246, %s247
      %p251 = pneg %p245
      %p252 = scmp.eq.s32.totalorder %s21, 7
      %p253 = por %p251, %p252
      %p254 = scmp.ne.s32.totalorder %s246, %s249
      %p255 = scmp.eq.s32.totalorder %s21, 0
      %p256 = por %p254, %p255
      %p257 = scmp.ne.s32.totalorder %s246, %s249
      %p258 = scmp.eq.s32.totalorder %s26, 7
      %p259 = por %p257, %p258
      %p260 = scmp.ne.s32.totalorder %s249, %s250
      %p261 = scmp.eq.s32.totalorder %s26, 0
      %p262 = por %p260, %p261
      %p263 = scmp.ne.s32.totalorder %s249, %s250
      %p264 = scmp.eq.s32.totalorder %s27, 7
      %p265 = por %p263, %p264
      %p267 = scmp.ne.s32.totalorder %s250, %s266
      %p268 = scmp.eq.s32.totalorder %s27, 0
      %p269 = por %p267, %p268
      %s271 = sadd.s32 %s270, 1
      %p274 = scmp.eq.s32.totalorder %s21, 7
      %p275 = scmp.ne.s32.totalorder %s270, %s272
      %p276 = scmp.eq.s32.totalorder %s21, 0
      %p277 = por %p275, %p276
      %p278 = scmp.ne.s32.totalorder %s270, %s272
      %p279 = scmp.eq.s32.totalorder %s26, 7
      %p280 = por %p278, %p279
      %p281 = scmp.ne.s32.totalorder %s272, %s273
      %p282 = scmp.eq.s32.totalorder %s26, 0
      %p283 = por %p281, %p282
      %p284 = scmp.ne.s32.totalorder %s272, %s273
      %p285 = scmp.eq.s32.totalorder %s27, 7
      %p286 = por %p284, %p285
      %p288 = scmp.ne.s32.totalorder %s273, %s287
      %p289 = scmp.eq.s32.totalorder %s27, 0
      %p290 = por %p288, %p289
      %p291 = scmp.le.s32.totalorder 1, %s21
      %p292 = scmp.lt.s32.totalorder %s21, 9
      %p293 = pnand %p291, %p292
      %p294 = pneg %p293
      // Predicated region
      $region9: #{ernn_rollout.1} parent=5 // pred_check
        _
      $region10: #{ernn_rollout.1} parent=5 // pred_check_branch
        %296 = sbr.rel (%p293) target = $region12
      $region11: #{ernn_rollout.1} parent=5 // pred_region
        %s297 = ssub.s32 %s21, 1
        // Predicated region
        $region13: #{ernn_rollout.1} parent=11 // pred_check
          %p298 = pneg %p68
        $region14: #{ernn_rollout.1} parent=11 // pred_check_branch
          %300 = sbr.rel (%p298) target = $region16
        $region15: #{ernn_rollout.1} parent=11 // pred_region
          _
        $region16: #{ernn_rollout.1} parent=11 // pred_fallthru
          _
        // Predicated region
        $region17: #{ernn_rollout.1} parent=11 // pred_check
          %p301 = pneg %p89
        $region18: #{ernn_rollout.1} parent=11 // pred_check_branch
          %303 = sbr.rel (%p301) target = $region20
        $region19: #{ernn_rollout.1} parent=11 // pred_region
          _
        $region20: #{ernn_rollout.1} parent=11 // pred_fallthru
          _
        // Predicated region
        $region21: #{ernn_rollout.1} parent=11 // pred_check
          %p304 = pneg %p110
        $region22: #{ernn_rollout.1} parent=11 // pred_check_branch
          %306 = sbr.rel (%p304) target = $region24
        $region23: #{ernn_rollout.1} parent=11 // pred_region
          %s308 = ssub.s32 16, 16
          %309 = vsyncadd [#allocation4], %s308
          %s311 = sshll.u32 [#allocation3], 4
          %s312 = int_to_ptr.vmem [resolvable:$true] %s311
          %314 = dma.hbm_to_vmem [thread:$0]  %s3, 16, %s312, [#allocation4]
        $region24: #{ernn_rollout.1} parent=11 // pred_fallthru
          _
        // Predicated region
        $region25: #{ernn_rollout.1} parent=11 // pred_check
          %p315 = pneg %p131
        $region26: #{ernn_rollout.1} parent=11 // pred_check_branch
          %317 = sbr.rel (%p315) target = $region28
        $region27: #{ernn_rollout.1} parent=11 // pred_region
          %s319 = ssub.s32 6144, 6144
          %320 = vsyncadd [#allocation6], %s319
          %s321 = sshll.u32 [#allocation5], 4
          %s322 = int_to_ptr.vmem [resolvable:$true] %s321
          %327 = dma.hbm_to_vmem [thread:$0]  %s4, 6144, %s322, [#allocation6], 384, 384, 24
        $region28: #{ernn_rollout.1} parent=11 // pred_fallthru
          _
        // Predicated region
        $region29: #{ernn_rollout.1} parent=11 // pred_check
          %p328 = pneg %p152
        $region30: #{ernn_rollout.1} parent=11 // pred_check_branch
          %330 = sbr.rel (%p328) target = $region32
        $region31: #{ernn_rollout.1} parent=11 // pred_region
          %s332 = ssub.s32 6144, 6144
          %333 = vsyncadd [#allocation6], %s332
          %s334 = sshll.u32 [#allocation7], 4
          %s335 = int_to_ptr.vmem [resolvable:$true] %s334
          %340 = dma.hbm_to_vmem [thread:$0]  %s5, 6144, %s335, [#allocation6], 384, 384, 24
        $region32: #{ernn_rollout.1} parent=11 // pred_fallthru
          _
        // Predicated region
        $region33: #{ernn_rollout.1} parent=11 // pred_check
          %p341 = pneg %p173
        $region34: #{ernn_rollout.1} parent=11 // pred_check_branch
          %343 = sbr.rel (%p341) target = $region36
        $region35: #{ernn_rollout.1} parent=11 // pred_region
          _
        $region36: #{ernn_rollout.1} parent=11 // pred_fallthru
          _
        // Predicated region
        $region37: #{ernn_rollout.1} parent=11 // pred_check
          %p344 = pneg %p194
        $region38: #{ernn_rollout.1} parent=11 // pred_check_branch
          %346 = sbr.rel (%p344) target = $region40
        $region39: #{ernn_rollout.1} parent=11 // pred_region
          %s348 = ssub.s32 48, 48
          %349 = vsyncadd [#allocation9], %s348
          %s351 = sshll.u32 [#allocation8], 4
          %s352 = int_to_ptr.vmem [resolvable:$true] %s351
          %354 = dma.hbm_to_vmem [thread:$0]  %s7, 48, %s352, [#allocation9]
        $region40: #{ernn_rollout.1} parent=11 // pred_fallthru
          _
        // Predicated region
        $region41: #{ernn_rollout.1} parent=11 // pred_check
          %p355 = pneg %p215
        $region42: #{ernn_rollout.1} parent=11 // pred_check_branch
          %357 = sbr.rel (%p355) target = $region44
        $region43: #{ernn_rollout.1} parent=11 // pred_region
          _
        $region44: #{ernn_rollout.1} parent=11 // pred_fallthru
          _
        // Predicated region
        $region45: #{ernn_rollout.1} parent=11 // pred_check
          %p358 = pneg %p236
        $region46: #{ernn_rollout.1} parent=11 // pred_check_branch
          %360 = sbr.rel (%p358) target = $region48
        $region47: #{ernn_rollout.1} parent=11 // pred_region
          %s362 = ssub.s32 16, 16
          %363 = vsyncadd [#allocation9], %s362
          %s365 = sshll.u32 [#allocation10], 4
          %s366 = int_to_ptr.vmem [resolvable:$true] %s365
          %368 = dma.hbm_to_vmem [thread:$0]  %s9, 16, %s366, [#allocation9]
        $region48: #{ernn_rollout.1} parent=11 // pred_fallthru
          _
      $region12: #{ernn_rollout.1} parent=5 // pred_fallthru
        _
      %p369 = scmp.lt.s32.totalorder %s21, 8
      // Predicated region
      $region49: #{ernn_rollout.1} parent=5 // pred_check
        %p370 = pneg %p369
      $region50: #{ernn_rollout.1} parent=5 // pred_check_branch
        %372 = sbr.rel (%p370) target = $region52
      $region51: #{ernn_rollout.1} parent=5 // pred_region
        // Predicated region
        $region53: #{ernn_rollout.1} parent=51 // pred_check
          %p373 = pneg %p41
        $region54: #{ernn_rollout.1} parent=51 // pred_check_branch
          %375 = sbr.rel (%p373) target = $region56
        $region55: #{ernn_rollout.1} parent=51 // pred_region
          %p376 = scmp.lt.s32.totalorder %s21, 7
          %s377 = scalar_select %p376, %s21, 7
          %s378 = smul.addr %s377, 8
          %s379 = scalar_lea.vmem %s0, %s378
        $region56: #{ernn_rollout.1} parent=51 // pred_fallthru
          _
      $region52: #{ernn_rollout.1} parent=5 // pred_fallthru
        _
      %p380 = scmp.le.s32.totalorder 1, %s21
      %p381 = scmp.lt.s32.totalorder %s21, 9
      %p382 = pnand %p380, %p381
      %p383 = pneg %p382
      // Predicated region
      $region57: #{ernn_rollout.1} parent=5 // pred_check
        _
      $region58: #{ernn_rollout.1} parent=5 // pred_check_branch
        %385 = sbr.rel (%p382) target = $region60
      $region59: #{ernn_rollout.1} parent=5 // pred_region
        %s386 = ssub.s32 %s21, 1
        // Predicated region
        $region61: #{ernn_rollout.1} parent=59 // pred_check
          %p387 = pneg %p110
        $region62: #{ernn_rollout.1} parent=59 // pred_check_branch
          %389 = sbr.rel (%p387) target = $region64
        $region63: #{ernn_rollout.1} parent=59 // pred_region
          %390 = dma.done [#allocation4], 16
        $region64: #{ernn_rollout.1} parent=59 // pred_fallthru
          _
        // Predicated region
        $region65: #{ernn_rollout.1} parent=59 // pred_check
          %p391 = pneg %p131
        $region66: #{ernn_rollout.1} parent=59 // pred_check_branch
          %393 = sbr.rel (%p391) target = $region68
        $region67: #{ernn_rollout.1} parent=59 // pred_region
          %394 = dma.done [#allocation6], 6144
        $region68: #{ernn_rollout.1} parent=59 // pred_fallthru
          _
        // Predicated region
        $region69: #{ernn_rollout.1} parent=59 // pred_check
          %p395 = pneg %p152
        $region70: #{ernn_rollout.1} parent=59 // pred_check_branch
          %397 = sbr.rel (%p395) target = $region72
        $region71: #{ernn_rollout.1} parent=59 // pred_region
          %398 = dma.done [#allocation6], 6144
        $region72: #{ernn_rollout.1} parent=59 // pred_fallthru
          _
        // Predicated region
        $region73: #{ernn_rollout.1} parent=59 // pred_check
          %p399 = pneg %p194
        $region74: #{ernn_rollout.1} parent=59 // pred_check_branch
          %401 = sbr.rel (%p399) target = $region76
        $region75: #{ernn_rollout.1} parent=59 // pred_region
          %402 = dma.done [#allocation9], 48
        $region76: #{ernn_rollout.1} parent=59 // pred_fallthru
          _
        // Predicated region
        $region77: #{ernn_rollout.1} parent=59 // pred_check
          %p403 = pneg %p236
        $region78: #{ernn_rollout.1} parent=59 // pred_check_branch
          %405 = sbr.rel (%p403) target = $region80
        $region79: #{ernn_rollout.1} parent=59 // pred_region
          %406 = dma.done [#allocation9], 16
        $region80: #{ernn_rollout.1} parent=59 // pred_fallthru
          _
        %p407 = scmp.lt.s32.totalorder %s26, 7
        %s408 = scalar_select %p407, %s26, 7
        %s409 = smul.addr %s408, 8
        %s410 = scalar_lea.vmem %s0, %s409
        %p411 = pneg %p47
        %p412 = pneg %p44
        %p413 = pneg %p68
        %p414 = pneg %p65
        %p415 = pneg %p89
        %p416 = pneg %p86
        %p417 = pneg %p110
        %p418 = pneg %p107
        %p419 = pneg %p131
        %p420 = pneg %p128
        %p421 = pneg %p152
        %p422 = pneg %p149
        %p423 = pneg %p173
        %p424 = pneg %p170
        %p425 = pneg %p194
        %p426 = pneg %p191
        %p427 = pneg %p215
        %p428 = pneg %p212
        %p429 = pneg %p236
        %p430 = pneg %p233
        %p431 = pneg %p262
        %p432 = pneg %p259
        %p433 = scmp.lt.s32.totalorder %s26, 7
        %s434 = scalar_select %p433, %s26, 7
        %s435 = smul.addr %s434, 8
        %s436 = scalar_lea.vmem %s10, %s435
        %p437 = pneg %p283
        %p438 = pneg %p280
        %p439 = scmp.lt.s32.totalorder %s26, 7
        %s440 = scalar_select %p439, %s26, 7
        %s441 = smul.addr %s440, 8
        %s442 = scalar_lea.vmem %s0, %s441
        %p443 = scmp.lt.s32.totalorder %s26, 7
        %s444 = scalar_select %p443, %s26, 7
        %s445 = smul.addr %s444, 8
        %s446 = scalar_lea.vmem %s10, %s445
        %p447 = scmp.eq.s32.totalorder %s26, 0
        // Predicated region
        $region81: #{ernn_rollout.1} parent=59 // pred_check
          %p448 = pneg %p447
        $region82: #{ernn_rollout.1} parent=59 // pred_check_branch
          %450 = sbr.rel (%p448) target = $region84
        $region83: #{ernn_rollout.1} parent=59 // pred_region
          %v451 = vld [vmem:[%s1] sm:$0xff]
          %452 = vst [vmem:[#allocation2] sm:$0xff] %v451
        $region84: #{ernn_rollout.1} parent=59 // pred_fallthru
          _
        %v453 = vld [vmem:[%s442] sm:$0xff]
        %v454 = vld [vmem:[#allocation2] sm:$0xff]
        %v455 = vld [vmem:[%s2] sm:$0xff]
        %v456 = vld [vmem:[%s2 + $0x8] sm:$0xff]
        %v457 = vld [vmem:[%s2 + $0x10] sm:$0xff]
        %v458 = vld [vmem:[%s2 + $0x18] sm:$0xff]
        %v459 = vld [vmem:[#allocation3] sm:$0x1]
        %v461 = vlaneseq
        %v462 = vshrl.u32 %v461, 7
        %v463 = vsub.s32 0, %v462
        %v464 = vrot.slane %v459, %v463
        %vm466 = vcmask 261120
        %v468 = vsel %vm466, %v453, 0
        %470 = vmatprep.subr.mxu0 0.0
        %471 = vmatpush1.msra.mxu0 %v455
        %472 = vmatprep.subr.mxu0 0.0
        %473 = vmatpush1.msra.mxu0 %v456
        %474 = vmatprep.subr.mxu0 0.0
        %475 = vmatpush1.msra.mxu0 %v457
        %476 = vmatprep.subr.mxu0 0.0
        %477 = vmatpush1.msra.mxu0 %v458
        %478 = vmatprep.subr.mxu0 0.0
        %479 = vmatpush1.msra.mxu0 0.0
        %480 = vmatprep.subr.mxu0 0.0
        %481 = vmatpush1.msra.mxu0 0.0
        %482 = vmatprep.subr.mxu0 0.0
        %483 = vmatpush1.msra.mxu0 0.0
        %484 = vmatprep.subr.mxu0 0.0
        %485 = vmatpush1.msra.mxu0 0.0
        %486 = vmatprep.subr.mxu0 0.0
        %487 = vmatpush1.msra.mxu0 0.0
        %488 = vmatprep.subr.mxu0 0.0
        %489 = vmatpush1.msra.mxu0 0.0
        %490 = vmatprep.subr.mxu0 0.0
        %491 = vmatpush1.msra.mxu0 0.0
        %492 = vmatprep.subr.mxu0 0.0
        %493 = vmatpush1.msra.mxu0 0.0
        %494 = vmatprep.subr.mxu0 0.0
        %495 = vmatpush1.msra.mxu0 0.0
        %496 = vmatprep.subr.mxu0 0.0
        %497 = vmatpush1.msra.mxu0 0.0
        %498 = vmatprep.subr.mxu0 0.0
        %499 = vmatpush1.msra.mxu0 0.0
        %500 = vmatprep.subr.mxu0 0.0
        %501 = vmatpush1.msra.mxu0 0.0
        %502 = vmatprep.subr.mxu0 0.0
        %503 = vmatpush1.msra.mxu0 0.0
        %504 = vmatprep.subr.mxu0 0.0
        %505 = vmatpush1.msra.mxu0 0.0
        %506 = vmatprep.subr.mxu0 0.0
        %507 = vmatpush1.msra.mxu0 0.0
        %508 = vmatprep.subr.mxu0 0.0
        %509 = vmatpush1.msra.mxu0 0.0
        %510 = vmatprep.subr.mxu0 0.0
        %511 = vmatpush1.msra.mxu0 0.0
        %512 = vmatprep.subr.mxu0 0.0
        %513 = vmatpush1.msra.mxu0 0.0
        %514 = vmatprep.subr.mxu0 0.0
        %515 = vmatpush1.msra.mxu0 0.0
        %516 = vmatprep.subr.mxu0 0.0
        %517 = vmatpush1.msra.mxu0 0.0
        %518 = vmatprep.subr.mxu0 0.0
        %519 = vmatpush1.msra.mxu0 0.0
        %520 = vmatprep.subr.mxu0 0.0
        %521 = vmatpush1.msra.mxu0 0.0
        %522 = vmatprep.subr.mxu0 0.0
        %523 = vmatpush1.msra.mxu0 0.0
        %524 = vmatprep.subr.mxu0 0.0
        %525 = vmatpush1.msra.mxu0 0.0
        %526 = vmatprep.subr.mxu0 0.0
        %527 = vmatpush1.msra.mxu0 0.0
        %528 = vmatprep.subr.mxu0 0.0
        %529 = vmatpush1.msra.mxu0 0.0
        %530 = vmatprep.subr.mxu0 0.0
        %531 = vmatpush1.msra.mxu0 0.0
        %532 = vmatprep.subr.mxu0 0.0
        %533 = vmatpush1.msra.mxu0 0.0
        %534 = vmatprep.mubr.f32.mxu0 0.0
        %535 = vmatmul.mubr.f32.gmra.mrb[0].mxu0 %v468
        %v536 = vpop.f32.mrb[0].mxu0
        %v537 = vadd.f32 %v464, %v536
        %v538 = vpop.f32.mrb[0].mxu0
        %539 = vdwg.mxu0
        %v540 = vmax.f32 %v537, 0.0
        %v541 = vld [vmem:[#allocation5] sm:$0xff]
        %v542 = vld [vmem:[#allocation5 + $0x8] sm:$0xff]
        %v543 = vld [vmem:[#allocation5 + $0x10] sm:$0xff]
        %v544 = vld [vmem:[#allocation5 + $0x18] sm:$0xff]
        %v545 = vld [vmem:[#allocation5 + $0x20] sm:$0xff]
        %v546 = vld [vmem:[#allocation5 + $0x28] sm:$0xff]
        %v547 = vld [vmem:[#allocation5 + $0x30] sm:$0xff]
        %v548 = vld [vmem:[#allocation5 + $0x38] sm:$0xff]
        %v549 = vld [vmem:[#allocation5 + $0x40] sm:$0xff]
        %v550 = vld [vmem:[#allocation5 + $0x48] sm:$0xff]
        %v551 = vld [vmem:[#allocation5 + $0x50] sm:$0xff]
        %v552 = vld [vmem:[#allocation5 + $0x58] sm:$0xff]
        %v553 = vld [vmem:[#allocation5 + $0x60] sm:$0xff]
        %v554 = vld [vmem:[#allocation5 + $0x68] sm:$0xff]
        %v555 = vld [vmem:[#allocation5 + $0x70] sm:$0xff]
        %v556 = vld [vmem:[#allocation5 + $0x78] sm:$0xff]
        %v557 = vld [vmem:[#allocation5 + $0x80] sm:$0xff]
        %v558 = vld [vmem:[#allocation5 + $0x88] sm:$0xff]
        %v559 = vld [vmem:[#allocation5 + $0x90] sm:$0xff]
        %v560 = vld [vmem:[#allocation5 + $0x98] sm:$0xff]
        %v561 = vld [vmem:[#allocation5 + $0xa0] sm:$0xff]
        %v562 = vld [vmem:[#allocation5 + $0xa8] sm:$0xff]
        %v563 = vld [vmem:[#allocation5 + $0xb0] sm:$0xff]
        %v564 = vld [vmem:[#allocation5 + $0xb8] sm:$0xff]
        %v565 = vld [vmem:[#allocation5 + $0xc0] sm:$0xff]
        %v566 = vld [vmem:[#allocation5 + $0xc8] sm:$0xff]
        %v567 = vld [vmem:[#allocation5 + $0xd0] sm:$0xff]
        %v568 = vld [vmem:[#allocation5 + $0xd8] sm:$0xff]
        %v569 = vld [vmem:[#allocation5 + $0xe0] sm:$0xff]
        %v570 = vld [vmem:[#allocation5 + $0xe8] sm:$0xff]
        %v571 = vld [vmem:[#allocation5 + $0xf0] sm:$0xff]
        %v572 = vld [vmem:[#allocation5 + $0xf8] sm:$0xff]
        %v573 = vld [vmem:[#allocation5 + $0x100] sm:$0xff]
        %v574 = vld [vmem:[#allocation5 + $0x108] sm:$0xff]
        %v575 = vld [vmem:[#allocation5 + $0x110] sm:$0xff]
        %v576 = vld [vmem:[#allocation5 + $0x118] sm:$0xff]
        %v577 = vld [vmem:[#allocation5 + $0x120] sm:$0xff]
        %v578 = vld [vmem:[#allocation5 + $0x128] sm:$0xff]
        %v579 = vld [vmem:[#allocation5 + $0x130] sm:$0xff]
        %v580 = vld [vmem:[#allocation5 + $0x138] sm:$0xff]
        %v581 = vld [vmem:[#allocation5 + $0x140] sm:$0xff]
        %v582 = vld [vmem:[#allocation5 + $0x148] sm:$0xff]
        %v583 = vld [vmem:[#allocation5 + $0x150] sm:$0xff]
        %v584 = vld [vmem:[#allocation5 + $0x158] sm:$0xff]
        %v585 = vld [vmem:[#allocation5 + $0x160] sm:$0xff]
        %v586 = vld [vmem:[#allocation5 + $0x168] sm:$0xff]
        %v587 = vld [vmem:[#allocation5 + $0x170] sm:$0xff]
        %v588 = vld [vmem:[#allocation5 + $0x178] sm:$0xff]
        %v589 = vld [vmem:[%s6] sm:$0x7]
        %v591 = vlaneseq
        %v592 = vshrl.u32 %v591, 7
        %v593 = vsub.s32 0, %v592
        %v594 = vrot.slane %v589, %v593
        %v595 = vlaneseq
        %v596 = vshrl.u32 %v595, 7
        %v597 = vsub.s32 1, %v596
        %v598 = vrot.slane %v589, %v597
        %v599 = vlaneseq
        %v600 = vshrl.u32 %v599, 7
        %v601 = vsub.s32 2, %v600
        %v602 = vrot.slane %v589, %v601
        %606 = vmatprep.subr.mxu0 %v542
        %607 = vmatpush1.msra.mxu0 %v541
        %608 = vmatprep.subr.mxu0 %v545
        %609 = vmatpush1.msra.mxu0 %v544
        %610 = vmatprep.subr.mxu0 %v548
        %611 = vmatpush1.msra.mxu0 %v547
        %612 = vmatprep.subr.mxu0 %v551
        %613 = vmatpush1.msra.mxu0 %v550
        %614 = vmatprep.subr.mxu0 %v554
        %615 = vmatpush1.msra.mxu0 %v553
        %616 = vmatprep.subr.mxu0 %v557
        %617 = vmatpush1.msra.mxu0 %v556
        %618 = vmatprep.subr.mxu0 %v560
        %619 = vmatpush1.msra.mxu0 %v559
        %620 = vmatprep.subr.mxu0 %v563
        %621 = vmatpush1.msra.mxu0 %v562
        %622 = vmatprep.subr.mxu0 %v566
        %623 = vmatpush1.msra.mxu0 %v565
        %624 = vmatprep.subr.mxu0 %v569
        %625 = vmatpush1.msra.mxu0 %v568
        %626 = vmatprep.subr.mxu0 %v572
        %627 = vmatpush1.msra.mxu0 %v571
        %628 = vmatprep.subr.mxu0 %v575
        %629 = vmatpush1.msra.mxu0 %v574
        %630 = vmatprep.subr.mxu0 %v578
        %631 = vmatpush1.msra.mxu0 %v577
        %632 = vmatprep.subr.mxu0 %v581
        %633 = vmatpush1.msra.mxu0 %v580
        %634 = vmatprep.subr.mxu0 %v584
        %635 = vmatpush1.msra.mxu0 %v583
        %636 = vmatprep.subr.mxu0 %v587
        %637 = vmatpush1.msra.mxu0 %v586
        %638 = vmatprep.subr.mxu0 0.0
        %639 = vmatpush1.msra.mxu0 0.0
        %640 = vmatprep.subr.mxu0 0.0
        %641 = vmatpush1.msra.mxu0 0.0
        %642 = vmatprep.subr.mxu0 0.0
        %643 = vmatpush1.msra.mxu0 0.0
        %644 = vmatprep.subr.mxu0 0.0
        %645 = vmatpush1.msra.mxu0 0.0
        %646 = vmatprep.subr.mxu0 0.0
        %647 = vmatpush1.msra.mxu0 0.0
        %648 = vmatprep.subr.mxu0 0.0
        %649 = vmatpush1.msra.mxu0 0.0
        %650 = vmatprep.subr.mxu0 0.0
        %651 = vmatpush1.msra.mxu0 0.0
        %652 = vmatprep.subr.mxu0 0.0
        %653 = vmatpush1.msra.mxu0 0.0
        %654 = vmatprep.subr.mxu0 0.0
        %655 = vmatpush1.msra.mxu0 0.0
        %656 = vmatprep.subr.mxu0 0.0
        %657 = vmatpush1.msra.mxu0 0.0
        %658 = vmatprep.subr.mxu0 0.0
        %659 = vmatpush1.msra.mxu0 0.0
        %660 = vmatprep.subr.mxu0 0.0
        %661 = vmatpush1.msra.mxu0 0.0
        %662 = vmatprep.subr.mxu0 0.0
        %663 = vmatpush1.msra.mxu0 0.0
        %664 = vmatprep.subr.mxu0 0.0
        %665 = vmatpush1.msra.mxu0 0.0
        %666 = vmatprep.subr.mxu0 0.0
        %667 = vmatpush1.msra.mxu0 0.0
        %668 = vmatprep.subr.mxu0 0.0
        %669 = vmatpush1.msra.mxu0 0.0
        %670 = vmatprep.mubr.f32.mxu0 0.0
        %671 = vmatmul.mubr.f32.gmra.mrb[0].mxu0 %v540
        %v672 = vpop.f32.mrb[0].mxu0
        %v673 = vadd.f32 %v594, %v672
        %v674 = vpop.f32.mrb[0].mxu0
        %v675 = vadd.f32 %v598, %v674
        %676 = vdwg.mxu0
        %677 = vmatprep.subr.mxu0 0.0
        %678 = vmatpush1.msra.mxu0 %v543
        %679 = vmatprep.subr.mxu0 0.0
        %680 = vmatpush1.msra.mxu0 %v546
        %681 = vmatprep.subr.mxu0 0.0
        %682 = vmatpush1.msra.mxu0 %v549
        %683 = vmatprep.subr.mxu0 0.0
        %684 = vmatpush1.msra.mxu0 %v552
        %685 = vmatprep.subr.mxu0 0.0
        %686 = vmatpush1.msra.mxu0 %v555
        %687 = vmatprep.subr.mxu0 0.0
        %688 = vmatpush1.msra.mxu0 %v558
        %689 = vmatprep.subr.mxu0 0.0
        %690 = vmatpush1.msra.mxu0 %v561
        %691 = vmatprep.subr.mxu0 0.0
        %692 = vmatpush1.msra.mxu0 %v564
        %693 = vmatprep.subr.mxu0 0.0
        %694 = vmatpush1.msra.mxu0 %v567
        %695 = vmatprep.subr.mxu0 0.0
        %696 = vmatpush1.msra.mxu0 %v570
        %697 = vmatprep.subr.mxu0 0.0
        %698 = vmatpush1.msra.mxu0 %v573
        %699 = vmatprep.subr.mxu0 0.0
        %700 = vmatpush1.msra.mxu0 %v576
        %701 = vmatprep.subr.mxu0 0.0
        %702 = vmatpush1.msra.mxu0 %v579
        %703 = vmatprep.subr.mxu0 0.0
        %704 = vmatpush1.msra.mxu0 %v582
        %705 = vmatprep.subr.mxu0 0.0
        %706 = vmatpush1.msra.mxu0 %v585
        %707 = vmatprep.subr.mxu0 0.0
        %708 = vmatpush1.msra.mxu0 %v588
        %709 = vmatprep.subr.mxu0 0.0
        %710 = vmatpush1.msra.mxu0 0.0
        %711 = vmatprep.subr.mxu0 0.0
        %712 = vmatpush1.msra.mxu0 0.0
        %713 = vmatprep.subr.mxu0 0.0
        %714 = vmatpush1.msra.mxu0 0.0
        %715 = vmatprep.subr.mxu0 0.0
        %716 = vmatpush1.msra.mxu0 0.0
        %717 = vmatprep.subr.mxu0 0.0
        %718 = vmatpush1.msra.mxu0 0.0
        %719 = vmatprep.subr.mxu0 0.0
        %720 = vmatpush1.msra.mxu0 0.0
        %721 = vmatprep.subr.mxu0 0.0
        %722 = vmatpush1.msra.mxu0 0.0
        %723 = vmatprep.subr.mxu0 0.0
        %724 = vmatpush1.msra.mxu0 0.0
        %725 = vmatprep.subr.mxu0 0.0
        %726 = vmatpush1.msra.mxu0 0.0
        %727 = vmatprep.subr.mxu0 0.0
        %728 = vmatpush1.msra.mxu0 0.0
        %729 = vmatprep.subr.mxu0 0.0
        %730 = vmatpush1.msra.mxu0 0.0
        %731 = vmatprep.subr.mxu0 0.0
        %732 = vmatpush1.msra.mxu0 0.0
        %733 = vmatprep.subr.mxu0 0.0
        %734 = vmatpush1.msra.mxu0 0.0
        %735 = vmatprep.subr.mxu0 0.0
        %736 = vmatpush1.msra.mxu0 0.0
        %737 = vmatprep.subr.mxu0 0.0
        %738 = vmatpush1.msra.mxu0 0.0
        %739 = vmatprep.subr.mxu0 0.0
        %740 = vmatpush1.msra.mxu0 0.0
        %741 = vmatprep.mubr.f32.mxu0 0.0
        %742 = vmatmul.mubr.f32.gmra.mrb[0].mxu0 %v540
        %v743 = vpop.f32.mrb[0].mxu0
        %v744 = vadd.f32 %v602, %v743
        %v745 = vpop.f32.mrb[0].mxu0
        %746 = vdwg.mxu0
        %v747 = vld [vmem:[#allocation7] sm:$0xff]
        %v748 = vld [vmem:[#allocation7 + $0x8] sm:$0xff]
        %v749 = vld [vmem:[#allocation7 + $0x10] sm:$0xff]
        %v750 = vld [vmem:[#allocation7 + $0x18] sm:$0xff]
        %v751 = vld [vmem:[#allocation7 + $0x20] sm:$0xff]
        %v752 = vld [vmem:[#allocation7 + $0x28] sm:$0xff]
        %v753 = vld [vmem:[#allocation7 + $0x30] sm:$0xff]
        %v754 = vld [vmem:[#allocation7 + $0x38] sm:$0xff]
        %v755 = vld [vmem:[#allocation7 + $0x40] sm:$0xff]
        %v756 = vld [vmem:[#allocation7 + $0x48] sm:$0xff]
        %v757 = vld [vmem:[#allocation7 + $0x50] sm:$0xff]
        %v758 = vld [vmem:[#allocation7 + $0x58] sm:$0xff]
        %v759 = vld [vmem:[#allocation7 + $0x60] sm:$0xff]
        %v760 = vld [vmem:[#allocation7 + $0x68] sm:$0xff]
        %v761 = vld [vmem:[#allocation7 + $0x70] sm:$0xff]
        %v762 = vld [vmem:[#allocation7 + $0x78] sm:$0xff]
        %v763 = vld [vmem:[#allocation7 + $0x80] sm:$0xff]
        %v764 = vld [vmem:[#allocation7 + $0x88] sm:$0xff]
        %v765 = vld [vmem:[#allocation7 + $0x90] sm:$0xff]
        %v766 = vld [vmem:[#allocation7 + $0x98] sm:$0xff]
        %v767 = vld [vmem:[#allocation7 + $0xa0] sm:$0xff]
        %v768 = vld [vmem:[#allocation7 + $0xa8] sm:$0xff]
        %v769 = vld [vmem:[#allocation7 + $0xb0] sm:$0xff]
        %v770 = vld [vmem:[#allocation7 + $0xb8] sm:$0xff]
        %v771 = vld [vmem:[#allocation7 + $0xc0] sm:$0xff]
        %v772 = vld [vmem:[#allocation7 + $0xc8] sm:$0xff]
        %v773 = vld [vmem:[#allocation7 + $0xd0] sm:$0xff]
        %v774 = vld [vmem:[#allocation7 + $0xd8] sm:$0xff]
        %v775 = vld [vmem:[#allocation7 + $0xe0] sm:$0xff]
        %v776 = vld [vmem:[#allocation7 + $0xe8] sm:$0xff]
        %v777 = vld [vmem:[#allocation7 + $0xf0] sm:$0xff]
        %v778 = vld [vmem:[#allocation7 + $0xf8] sm:$0xff]
        %v779 = vld [vmem:[#allocation7 + $0x100] sm:$0xff]
        %v780 = vld [vmem:[#allocation7 + $0x108] sm:$0xff]
        %v781 = vld [vmem:[#allocation7 + $0x110] sm:$0xff]
        %v782 = vld [vmem:[#allocation7 + $0x118] sm:$0xff]
        %v783 = vld [vmem:[#allocation7 + $0x120] sm:$0xff]
        %v784 = vld [vmem:[#allocation7 + $0x128] sm:$0xff]
        %v785 = vld [vmem:[#allocation7 + $0x130] sm:$0xff]
        %v786 = vld [vmem:[#allocation7 + $0x138] sm:$0xff]
        %v787 = vld [vmem:[#allocation7 + $0x140] sm:$0xff]
        %v788 = vld [vmem:[#allocation7 + $0x148] sm:$0xff]
        %v789 = vld [vmem:[#allocation7 + $0x150] sm:$0xff]
        %v790 = vld [vmem:[#allocation7 + $0x158] sm:$0xff]
        %v791 = vld [vmem:[#allocation7 + $0x160] sm:$0xff]
        %v792 = vld [vmem:[#allocation7 + $0x168] sm:$0xff]
        %v793 = vld [vmem:[#allocation7 + $0x170] sm:$0xff]
        %v794 = vld [vmem:[#allocation7 + $0x178] sm:$0xff]
        %v795 = vld [vmem:[#allocation8] sm:$0x7]
        %v797 = vlaneseq
        %v798 = vshrl.u32 %v797, 7
        %v799 = vsub.s32 0, %v798
        %v800 = vrot.slane %v795, %v799
        %v801 = vlaneseq
        %v802 = vshrl.u32 %v801, 7
        %v803 = vsub.s32 1, %v802
        %v804 = vrot.slane %v795, %v803
        %v805 = vlaneseq
        %v806 = vshrl.u32 %v805, 7
        %v807 = vsub.s32 2, %v806
        %v808 = vrot.slane %v795, %v807
        %812 = vmatprep.subr.mxu0 %v748
        %813 = vmatpush1.msra.mxu0 %v747
        %814 = vmatprep.subr.mxu0 %v751
        %815 = vmatpush1.msra.mxu0 %v750
        %816 = vmatprep.subr.mxu0 %v754
        %817 = vmatpush1.msra.mxu0 %v753
        %818 = vmatprep.subr.mxu0 %v757
        %819 = vmatpush1.msra.mxu0 %v756
        %820 = vmatprep.subr.mxu0 %v760
        %821 = vmatpush1.msra.mxu0 %v759
        %822 = vmatprep.subr.mxu0 %v763
        %823 = vmatpush1.msra.mxu0 %v762
        %824 = vmatprep.subr.mxu0 %v766
        %825 = vmatpush1.msra.mxu0 %v765
        %826 = vmatprep.subr.mxu0 %v769
        %827 = vmatpush1.msra.mxu0 %v768
        %828 = vmatprep.subr.mxu0 %v772
        %829 = vmatpush1.msra.mxu0 %v771
        %830 = vmatprep.subr.mxu0 %v775
        %831 = vmatpush1.msra.mxu0 %v774
        %832 = vmatprep.subr.mxu0 %v778
        %833 = vmatpush1.msra.mxu0 %v777
        %834 = vmatprep.subr.mxu0 %v781
        %835 = vmatpush1.msra.mxu0 %v780
        %836 = vmatprep.subr.mxu0 %v784
        %837 = vmatpush1.msra.mxu0 %v783
        %838 = vmatprep.subr.mxu0 %v787
        %839 = vmatpush1.msra.mxu0 %v786
        %840 = vmatprep.subr.mxu0 %v790
        %841 = vmatpush1.msra.mxu0 %v789
        %842 = vmatprep.subr.mxu0 %v793
        %843 = vmatpush1.msra.mxu0 %v792
        %844 = vmatprep.subr.mxu0 0.0
        %845 = vmatpush1.msra.mxu0 0.0
        %846 = vmatprep.subr.mxu0 0.0
        %847 = vmatpush1.msra.mxu0 0.0
        %848 = vmatprep.subr.mxu0 0.0
        %849 = vmatpush1.msra.mxu0 0.0
        %850 = vmatprep.subr.mxu0 0.0
        %851 = vmatpush1.msra.mxu0 0.0
        %852 = vmatprep.subr.mxu0 0.0
        %853 = vmatpush1.msra.mxu0 0.0
        %854 = vmatprep.subr.mxu0 0.0
        %855 = vmatpush1.msra.mxu0 0.0
        %856 = vmatprep.subr.mxu0 0.0
        %857 = vmatpush1.msra.mxu0 0.0
        %858 = vmatprep.subr.mxu0 0.0
        %859 = vmatpush1.msra.mxu0 0.0
        %860 = vmatprep.subr.mxu0 0.0
        %861 = vmatpush1.msra.mxu0 0.0
        %862 = vmatprep.subr.mxu0 0.0
        %863 = vmatpush1.msra.mxu0 0.0
        %864 = vmatprep.subr.mxu0 0.0
        %865 = vmatpush1.msra.mxu0 0.0
        %866 = vmatprep.subr.mxu0 0.0
        %867 = vmatpush1.msra.mxu0 0.0
        %868 = vmatprep.subr.mxu0 0.0
        %869 = vmatpush1.msra.mxu0 0.0
        %870 = vmatprep.subr.mxu0 0.0
        %871 = vmatpush1.msra.mxu0 0.0
        %872 = vmatprep.subr.mxu0 0.0
        %873 = vmatpush1.msra.mxu0 0.0
        %874 = vmatprep.subr.mxu0 0.0
        %875 = vmatpush1.msra.mxu0 0.0
        %876 = vmatprep.mubr.f32.mxu0 0.0
        %877 = vmatmul.mubr.f32.gmra.mrb[0].mxu0 %v454
        %v878 = vpop.f32.mrb[0].mxu0
        %v879 = vadd.f32 %v800, %v878
        %v880 = vpop.f32.mrb[0].mxu0
        %v881 = vadd.f32 %v804, %v880
        %882 = vdwg.mxu0
        %883 = vmatprep.subr.mxu0 0.0
        %884 = vmatpush1.msra.mxu0 %v749
        %885 = vmatprep.subr.mxu0 0.0
        %886 = vmatpush1.msra.mxu0 %v752
        %887 = vmatprep.subr.mxu0 0.0
        %888 = vmatpush1.msra.mxu0 %v755
        %889 = vmatprep.subr.mxu0 0.0
        %890 = vmatpush1.msra.mxu0 %v758
        %891 = vmatprep.subr.mxu0 0.0
        %892 = vmatpush1.msra.mxu0 %v761
        %893 = vmatprep.subr.mxu0 0.0
        %894 = vmatpush1.msra.mxu0 %v764
        %895 = vmatprep.subr.mxu0 0.0
        %896 = vmatpush1.msra.mxu0 %v767
        %897 = vmatprep.subr.mxu0 0.0
        %898 = vmatpush1.msra.mxu0 %v770
        %899 = vmatprep.subr.mxu0 0.0
        %900 = vmatpush1.msra.mxu0 %v773
        %901 = vmatprep.subr.mxu0 0.0
        %902 = vmatpush1.msra.mxu0 %v776
        %903 = vmatprep.subr.mxu0 0.0
        %904 = vmatpush1.msra.mxu0 %v779
        %905 = vmatprep.subr.mxu0 0.0
        %906 = vmatpush1.msra.mxu0 %v782
        %907 = vmatprep.subr.mxu0 0.0
        %908 = vmatpush1.msra.mxu0 %v785
        %909 = vmatprep.subr.mxu0 0.0
        %910 = vmatpush1.msra.mxu0 %v788
        %911 = vmatprep.subr.mxu0 0.0
        %912 = vmatpush1.msra.mxu0 %v791
        %913 = vmatprep.subr.mxu0 0.0
        %914 = vmatpush1.msra.mxu0 %v794
        %915 = vmatprep.subr.mxu0 0.0
        %916 = vmatpush1.msra.mxu0 0.0
        %917 = vmatprep.subr.mxu0 0.0
        %918 = vmatpush1.msra.mxu0 0.0
        %919 = vmatprep.subr.mxu0 0.0
        %920 = vmatpush1.msra.mxu0 0.0
        %921 = vmatprep.subr.mxu0 0.0
        %922 = vmatpush1.msra.mxu0 0.0
        %923 = vmatprep.subr.mxu0 0.0
        %924 = vmatpush1.msra.mxu0 0.0
        %925 = vmatprep.subr.mxu0 0.0
        %926 = vmatpush1.msra.mxu0 0.0
        %927 = vmatprep.subr.mxu0 0.0
        %928 = vmatpush1.msra.mxu0 0.0
        %929 = vmatprep.subr.mxu0 0.0
        %930 = vmatpush1.msra.mxu0 0.0
        %931 = vmatprep.subr.mxu0 0.0
        %932 = vmatpush1.msra.mxu0 0.0
        %933 = vmatprep.subr.mxu0 0.0
        %934 = vmatpush1.msra.mxu0 0.0
        %935 = vmatprep.subr.mxu0 0.0
        %936 = vmatpush1.msra.mxu0 0.0
        %937 = vmatprep.subr.mxu0 0.0
        %938 = vmatpush1.msra.mxu0 0.0
        %939 = vmatprep.subr.mxu0 0.0
        %940 = vmatpush1.msra.mxu0 0.0
        %941 = vmatprep.subr.mxu0 0.0
        %942 = vmatpush1.msra.mxu0 0.0
        %943 = vmatprep.subr.mxu0 0.0
        %944 = vmatpush1.msra.mxu0 0.0
        %945 = vmatprep.subr.mxu0 0.0
        %946 = vmatpush1.msra.mxu0 0.0
        %947 = vmatprep.mubr.f32.mxu0 0.0
        %948 = vmatmul.mubr.f32.gmra.mrb[0].mxu0 %v454
        %v949 = vpop.f32.mrb[0].mxu0
        %v950 = vadd.f32 %v808, %v949
        %v951 = vpop.f32.mrb[0].mxu0
        %952 = vdwg.mxu0
        %v953 = vadd.f32 %v673, %v879
        %v954 = vxor.u32 %v953, 2147483648
        %v955 = vmul.f32 %v954, 1.442695
        %v956 = vpow.pop %v955
        %v957 = vadd.f32 %v956, 1.0
        %v958 = vrcp.pop %v957
        %v959 = vmul.f32 1.0, %v958
        %v960 = vadd.f32 %v675, %v881
        %v961 = vxor.u32 %v960, 2147483648
        %v962 = vmul.f32 %v961, 1.442695
        %v963 = vpow.pop %v962
        %v964 = vadd.f32 %v963, 1.0
        %v965 = vrcp.pop %v964
        %v966 = vmul.f32 1.0, %v965
        %v967 = vmul.f32 %v959, %v950
        %v968 = vadd.f32 %v744, %v967
        %v969 = vtanh.pop %v968
        %v970 = vsub.f32 1.0, %v966
        %v971 = vmul.f32 %v970, %v969
        %v972 = vmul.f32 %v966, %v454
        %v973 = vadd.f32 %v971, %v972
        %v974 = vld [vmem:[%s8] sm:$0xff]
        %v975 = vld [vmem:[%s8 + $0x8] sm:$0xff]
        %v976 = vld [vmem:[%s8 + $0x10] sm:$0xff]
        %v977 = vld [vmem:[%s8 + $0x18] sm:$0xff]
        %v978 = vld [vmem:[%s8 + $0x20] sm:$0xff]
        %v979 = vld [vmem:[%s8 + $0x28] sm:$0xff]
        %v980 = vld [vmem:[%s8 + $0x30] sm:$0xff]
        %v981 = vld [vmem:[%s8 + $0x38] sm:$0xff]
        %v982 = vld [vmem:[%s8 + $0x40] sm:$0xff]
        %v983 = vld [vmem:[%s8 + $0x48] sm:$0xff]
        %v984 = vld [vmem:[%s8 + $0x50] sm:$0xff]
        %v985 = vld [vmem:[%s8 + $0x58] sm:$0xff]
        %v986 = vld [vmem:[%s8 + $0x60] sm:$0xff]
        %v987 = vld [vmem:[%s8 + $0x68] sm:$0xff]
        %v988 = vld [vmem:[%s8 + $0x70] sm:$0xff]
        %v989 = vld [vmem:[%s8 + $0x78] sm:$0xff]
        %v990 = vld [vmem:[#allocation10] sm:$0x1]
        %v992 = vlaneseq
        %v993 = vshrl.u32 %v992, 7
        %v994 = vsub.s32 0, %v993
        %v995 = vrot.slane %v990, %v994
        %997 = vmatprep.subr.mxu0 0.0
        %998 = vmatpush1.msra.mxu0 %v974
        %999 = vmatprep.subr.mxu0 0.0
        %1000 = vmatpush1.msra.mxu0 %v975
        %1001 = vmatprep.subr.mxu0 0.0
        %1002 = vmatpush1.msra.mxu0 %v976
        %1003 = vmatprep.subr.mxu0 0.0
        %1004 = vmatpush1.msra.mxu0 %v977
        %1005 = vmatprep.subr.mxu0 0.0
        %1006 = vmatpush1.msra.mxu0 %v978
        %1007 = vmatprep.subr.mxu0 0.0
        %1008 = vmatpush1.msra.mxu0 %v979
        %1009 = vmatprep.subr.mxu0 0.0
        %1010 = vmatpush1.msra.mxu0 %v980
        %1011 = vmatprep.subr.mxu0 0.0
        %1012 = vmatpush1.msra.mxu0 %v981
        %1013 = vmatprep.subr.mxu0 0.0
        %1014 = vmatpush1.msra.mxu0 %v982
        %1015 = vmatprep.subr.mxu0 0.0
        %1016 = vmatpush1.msra.mxu0 %v983
        %1017 = vmatprep.subr.mxu0 0.0
        %1018 = vmatpush1.msra.mxu0 %v984
        %1019 = vmatprep.subr.mxu0 0.0
        %1020 = vmatpush1.msra.mxu0 %v985
        %1021 = vmatprep.subr.mxu0 0.0
        %1022 = vmatpush1.msra.mxu0 %v986
        %1023 = vmatprep.subr.mxu0 0.0
        %1024 = vmatpush1.msra.mxu0 %v987
        %1025 = vmatprep.subr.mxu0 0.0
        %1026 = vmatpush1.msra.mxu0 %v988
        %1027 = vmatprep.subr.mxu0 0.0
        %1028 = vmatpush1.msra.mxu0 %v989
        %1029 = vmatprep.subr.mxu0 0.0
        %1030 = vmatpush1.msra.mxu0 0.0
        %1031 = vmatprep.subr.mxu0 0.0
        %1032 = vmatpush1.msra.mxu0 0.0
        %1033 = vmatprep.subr.mxu0 0.0
        %1034 = vmatpush1.msra.mxu0 0.0
        %1035 = vmatprep.subr.mxu0 0.0
        %1036 = vmatpush1.msra.mxu0 0.0
        %1037 = vmatprep.subr.mxu0 0.0
        %1038 = vmatpush1.msra.mxu0 0.0
        %1039 = vmatprep.subr.mxu0 0.0
        %1040 = vmatpush1.msra.mxu0 0.0
        %1041 = vmatprep.subr.mxu0 0.0
        %1042 = vmatpush1.msra.mxu0 0.0
        %1043 = vmatprep.subr.mxu0 0.0
        %1044 = vmatpush1.msra.mxu0 0.0
        %1045 = vmatprep.subr.mxu0 0.0
        %1046 = vmatpush1.msra.mxu0 0.0
        %1047 = vmatprep.subr.mxu0 0.0
        %1048 = vmatpush1.msra.mxu0 0.0
        %1049 = vmatprep.subr.mxu0 0.0
        %1050 = vmatpush1.msra.mxu0 0.0
        %1051 = vmatprep.subr.mxu0 0.0
        %1052 = vmatpush1.msra.mxu0 0.0
        %1053 = vmatprep.subr.mxu0 0.0
        %1054 = vmatpush1.msra.mxu0 0.0
        %1055 = vmatprep.subr.mxu0 0.0
        %1056 = vmatpush1.msra.mxu0 0.0
        %1057 = vmatprep.subr.mxu0 0.0
        %1058 = vmatpush1.msra.mxu0 0.0
        %1059 = vmatprep.subr.mxu0 0.0
        %1060 = vmatpush1.msra.mxu0 0.0
        %1061 = vmatprep.mubr.f32.mxu0 0.0
        %1062 = vmatmul.mubr.f32.gmra.mrb[0].mxu0 %v973
        %v1063 = vpop.f32.mrb[0].mxu0
        %v1064 = vadd.f32 %v995, %v1063
        %v1065 = vpop.f32.mrb[0].mxu0
        %1066 = vdwg.mxu0
        %1067 = vst [vmem:[%s446] sm:$0xff] %v1064
        %1068 = vst [vmem:[#allocation2] sm:$0xff] %v973
        %1069 = vst [vmem:[%s11] sm:$0xff] %v973
        %p1070 = scmp.lt.s32.totalorder %s26, 7
        %s1071 = scalar_select %p1070, %s26, 7
        %s1072 = smul.addr %s1071, 8
        %s1073 = scalar_lea.vmem %s10, %s1072
        // Predicated region
        $region85: #{ernn_rollout.1} parent=59 // pred_check
          %p1074 = pneg %p259
        $region86: #{ernn_rollout.1} parent=59 // pred_check_branch
          %1076 = sbr.rel (%p1074) target = $region88
        $region87: #{ernn_rollout.1} parent=59 // pred_region
          _
        $region88: #{ernn_rollout.1} parent=59 // pred_fallthru
          _
        // Predicated region
        $region89: #{ernn_rollout.1} parent=59 // pred_check
          %p1077 = pneg %p280
        $region90: #{ernn_rollout.1} parent=59 // pred_check_branch
          %1079 = sbr.rel (%p1077) target = $region92
        $region91: #{ernn_rollout.1} parent=59 // pred_region
          _
        $region92: #{ernn_rollout.1} parent=59 // pred_fallthru
          _
        // Predicated region
        $region93: #{ernn_rollout.1} parent=59 // pred_check
          %p1080 = pneg %p280
        $region94: #{ernn_rollout.1} parent=59 // pred_check_branch
          %1082 = sbr.rel (%p1080) target = $region96
        $region95: #{ernn_rollout.1} parent=59 // pred_region
          _
        $region96: #{ernn_rollout.1} parent=59 // pred_fallthru
          _
      $region60: #{ernn_rollout.1} parent=5 // pred_fallthru
        _
      %p1083 = scmp.le.s32.totalorder 2, %s21
      // Predicated region
      $region97: #{ernn_rollout.1} parent=5 // pred_check
        %p1084 = pneg %p1083
      $region98: #{ernn_rollout.1} parent=5 // pred_check_branch
        %1086 = sbr.rel (%p1084) target = $region100
      $region99: #{ernn_rollout.1} parent=5 // pred_region
        %s1087 = ssub.s32 %s21, 2
        // Predicated region
        $region101: #{ernn_rollout.1} parent=99 // pred_check
          %p1088 = pneg %p265
        $region102: #{ernn_rollout.1} parent=99 // pred_check_branch
          %1090 = sbr.rel (%p1088) target = $region104
        $region103: #{ernn_rollout.1} parent=99 // pred_region
          %p1091 = scmp.lt.s32.totalorder %s27, 7
          %s1092 = scalar_select %p1091, %s27, 7
          %s1093 = smul.addr %s1092, 8
          %s1094 = scalar_lea.vmem %s10, %s1093
        $region104: #{ernn_rollout.1} parent=99 // pred_fallthru
          _
      $region100: #{ernn_rollout.1} parent=5 // pred_fallthru
        _
    $region6: #{ernn_rollout.1} parent=1 // loop_footer
      %s25 = sadd.s32 1, %s21
    $region7: #{ernn_rollout.1} parent=1 // loop_footer_branch
      %20 = sbr.rel target = $region3
    $region8: #{ernn_rollout.1} parent=1 // loop_exit
      _
    %1095 = vsyncpa [#allocation4], 1
    %s1096 = scalar_lea.sflag [#allocation4], 1
    %1097 = vsyncpa %s1096, 1
    %1098 = vsyncpa [#allocation6], 1
    %1099 = vsyncpa [#allocation9], 1

</llo_original>
